<compile_context>
chip_gen: v7x
topology: tpu7x:2x2x1
jax: 0.10.0
libtpu: 0.0.40
codegen_flags: <defaults>
</compile_context>

<pallas_src>
import functools

import jax
import jax.numpy as jnp
import numpy as np
from jax import lax
from jax.experimental import pallas as pl
from jax.experimental.pallas import tpu as pltpu

LANES = 128
SUB_ROWS = 1024                       # compute sub-chunk (bounds VMEM temporaries)
INPUT_BUFFER_BYTES = 6 * 1024 * 1024  # per input, per pipeline buffer
VMEM_LIMIT_BYTES = 40 * 1024 * 1024   # safe on v5e/v6e (128 MiB) and v7x (64 MiB)


def _default_nsplit():
    """2-way leading parallel axis only on multi-TensorCore-per-device chips."""
    try:
        kind = jax.devices()[0].device_kind.lower()
    except Exception:
        return 1
    return 2 if any(tag in kind for tag in ("v7", "v4", "v5p")) else 1


def _true3d_loss_kernel(recon_ref, target_ref, acc_ref, *,
                        timesteps, rows, tile_rows, sub_rows, n_sub,
                        blocks_per_slice, need_mask):
    c = pl.program_id(0)   # parallel slice (megacore axis)
    i = pl.program_id(1)   # sequential blocks within a slice (reduction axis)

    @pl.when(i == 0)
    def _init():
        acc_ref[...] = jnp.zeros_like(acc_ref)

    def to_index(x):
        # torch: x*T - 1 ; where(<0, 0) ; .long()   (v >= 0 -> trunc == floor)
        v = x.astype(jnp.float32) * timesteps - 1.0
        return jnp.maximum(v, 0.0).astype(jnp.int32)

    if n_sub == 0:
        # Direct path: small block (rows < SUB_ROWS), temporaries are tiny.
        m = (to_index(recon_ref[...]) != to_index(target_ref[...])).astype(jnp.int32)
        if tile_rows % 8 == 0:
            acc_ref[...] += m.reshape(tile_rows // 8, 8, LANES).sum(axis=0)[None]
        else:
            # Tiny full-extent block not sublane-aligned: one cross-sublane fold.
            acc_ref[0, 0:1, :] += m.sum(axis=0, keepdims=True)
        return

    # Chunked path: loop over sub_rows-row slices of the (tile_rows, 128) block
    # so element-wise temporaries stay ~sub-chunk sized regardless of DMA block.
    row_start = (c * blocks_per_slice + i) * tile_rows

    def make_body(masked):
        def body(j, carry):
            off = pl.multiple_of(j * sub_rows, sub_rows)
            a = to_index(recon_ref[pl.ds(off, sub_rows), :])
            b = to_index(target_ref[pl.ds(off, sub_rows), :])
            m = (a != b).astype(jnp.int32)
            if masked:
                rid = lax.broadcasted_iota(jnp.int32, m.shape, 0)
                m = jnp.where(rid < (rows - (row_start + off)), m, 0)
            # (sub_rows,128) -> (sub_rows//8, 8, 128) is tile-aligned (free view);
            # axis-0 sum is pure vreg-wise VPU adds into the (8,128) carry.
            return carry + m.reshape(sub_rows // 8, 8, LANES).sum(axis=0)
        return body

    zero = jnp.zeros((8, LANES), jnp.int32)

    if need_mask:
        # Only the ragged tail block / clamped over-coverage block pays the mask.
        is_full = row_start + tile_rows <= rows

        @pl.when(is_full)
        def _fast():
            acc_ref[...] += lax.fori_loop(0, n_sub, make_body(False), zero)[None]

        @pl.when(jnp.logical_not(is_full))
        def _tail():
            acc_ref[...] += lax.fori_loop(0, n_sub, make_body(True), zero)[None]
    else:
        acc_ref[...] += lax.fori_loop(0, n_sub, make_body(False), zero)[None]


def _mismatch_count(r2, t2, timesteps):
    """Count class-index mismatches over a (rows, 128) pair with one HBM pass."""
    rows = r2.shape[0]
    itemsize = max(jnp.dtype(r2.dtype).itemsize, jnp.dtype(t2.dtype).itemsize)
    # Byte-budgeted tiling; SUB_ROWS (1024) is a multiple of every packing
    # granule (8 f32 / 16 bf16 / 32 int8), so chunked tiles are always aligned.
    budget_rows = max(SUB_ROWS,
                      (INPUT_BUFFER_BYTES // (LANES * itemsize)) // SUB_ROWS * SUB_ROWS)

    nsplit = _default_nsplit()
    if rows >= SUB_ROWS:
        per_slice = pl.cdiv(rows, nsplit)
        if per_slice < SUB_ROWS:
            nsplit = 1
            per_slice = rows
        tile_rows = min(budget_rows, max(SUB_ROWS, (per_slice // SUB_ROWS) * SUB_ROWS))
        n_sub = tile_rows // SUB_ROWS
    else:
        nsplit = 1
        tile_rows = rows            # full-extent block (always legal)
        n_sub = 0

    blocks_total = pl.cdiv(rows, tile_rows)
    nsplit = min(nsplit, blocks_total)
    blocks_per_slice = pl.cdiv(blocks_total, nsplit)
    need_mask = (rows % tile_rows != 0) or (blocks_per_slice * nsplit != blocks_total)

    def in_map(c, i):
        # Clamp so an over-covering (c, i) never yields an OOB block index; the
        # in-kernel row mask zeroes such a block's contribution.
        return (jnp.minimum(c * blocks_per_slice + i, blocks_total - 1), 0)

    kernel = functools.partial(
        _true3d_loss_kernel, timesteps=float(timesteps), rows=rows,
        tile_rows=tile_rows, sub_rows=SUB_ROWS, n_sub=n_sub,
        blocks_per_slice=blocks_per_slice, need_mask=need_mask)

    acc = pl.pallas_call(
        kernel,
        out_shape=jax.ShapeDtypeStruct((nsplit, 8, LANES), jnp.int32),
        grid_spec=pltpu.PrefetchScalarGridSpec(
            num_scalar_prefetch=0,
            grid=(nsplit, blocks_per_slice),
            in_specs=[pl.BlockSpec((tile_rows, LANES), in_map),
                      pl.BlockSpec((tile_rows, LANES), in_map)],
            out_specs=pl.BlockSpec((1, 8, LANES), lambda c, i: (c, 0, 0)),
        ),
        compiler_params=pltpu.CompilerParams(
            dimension_semantics=("parallel", "arbitrary"),
            vmem_limit_bytes=VMEM_LIMIT_BYTES),
    )(r2, t2)

    # int32 accumulation is exact up to 2^31 total mismatches per call.
    return jnp.sum(acc)


def true3d_loss(reconstructed, target, *, timesteps=1000,
                zero_weighting=1.0, nonzero_weighting=1.0):
    assert reconstructed.shape == target.shape
    num_valid = int(np.prod(reconstructed.shape))
    if num_valid == 0:
        return jnp.float32(0.0)

    r = reconstructed.reshape(-1)
    t = target.reshape(-1)

    rows = num_valid // LANES
    main = rows * LANES

    def to_index(x):
        v = x.astype(jnp.float32) * float(timesteps) - 1.0
        return jnp.maximum(v, 0.0).astype(jnp.int32)

    mismatches = jnp.zeros((), jnp.int32)

    if main < num_valid:
        # <128-element tail handled with plain jnp: no host-side jnp.pad copy of
        # both full tensors just to 128-align them.
        mismatches = mismatches + jnp.sum(
            (to_index(r[main:]) != to_index(t[main:])).astype(jnp.int32))

    if rows > 0:
        r2 = (r if main == num_valid else r[:main]).reshape(rows, LANES)
        t2 = (t if main == num_valid else t[:main]).reshape(rows, LANES)
        mismatches = mismatches + _mismatch_count(r2, t2, timesteps)

    mism = mismatches.astype(jnp.float32)
    # Masked-MSE == mismatch count; denominators are compile-time constants:
    #   zero-mask count    = num_valid * (timesteps - 1)
    #   nonzero-mask count = num_valid
    cnt_zero = num_valid * (timesteps - 1)
    cnt_nonzero = num_valid
    zero_loss = mism / cnt_zero if cnt_zero > 0 else 0.0          # torch NaN->0 guard
    nonzero_loss = mism / cnt_nonzero if cnt_nonzero > 0 else 0.0
    return zero_weighting * zero_loss + nonzero_weighting * nonzero_loss


def reference_true3d_loss(reconstructed, target, timesteps=1000,
                          zero_weighting=1.0, nonzero_weighting=1.0):
    """Literal pure-JAX port of the PyTorch forward (one-hot + masked MSE)."""
    def expand(x):
        v = x * timesteps - 1.0
        v = jnp.where(v < 0, 0.0, v)
        idx = v.astype(jnp.int32)
        b, c = x.shape[0], x.shape[1]
        idx = idx.reshape(b, c, -1)
        return jax.nn.one_hot(idx, timesteps, axis=2, dtype=jnp.float32)

    r3 = expand(reconstructed)
    t3 = expand(target)
    zero_mask = t3 == 0
    nonzero_mask = ~zero_mask
    sq = (r3 - t3) ** 2
    nz0 = jnp.sum(zero_mask).astype(jnp.float32)
    nz1 = jnp.sum(nonzero_mask).astype(jnp.float32)
    zero_loss = jnp.where(nz0 > 0, jnp.sum(jnp.where(zero_mask, sq, 0.0)) / nz0, 0.0)
    nonzero_loss = jnp.where(nz1 > 0, jnp.sum(jnp.where(nonzero_mask, sq, 0.0)) / nz1, 0.0)
    return zero_weighting * zero_loss + nonzero_weighting * nonzero_loss


if __name__ == "__main__":
    key = jax.random.PRNGKey(0)
    k1, k2, k3, k4, k5, k6 = jax.random.split(key, 6)

    # Test 1: canonical small NCHW shape (direct single-block path).
    B, C, H, W = 2, 4, 16, 16
    r1 = jax.random.uniform(k1, (B, C, H, W), dtype=jnp.float32)
    t1 = jax.random.uniform(k2, (B, C, H, W), dtype=jnp.float32)
    out1 = jax.block_until_ready(true3d_loss(r1, t1, timesteps=1000))
    ref1 = reference_true3d_loss(r1, t1, timesteps=1000)
    np.testing.assert_allclose(np.asarray(out1), np.asarray(ref1), rtol=1e-5, atol=1e-7)

    # Test 2: exercises the chunked fori_loop path, the masked ragged tail
    # block, and the <128-element jnp tail (no host-side pad).
    r2 = jax.random.uniform(k3, (2, 4, 201, 200), dtype=jnp.float32)
    t2 = jax.random.uniform(k4, (2, 4, 201, 200), dtype=jnp.float32)
    out2 = jax.block_until_ready(true3d_loss(r2, t2, timesteps=32,
                                             zero_weighting=0.5, nonzero_weighting=2.0))
    ref2 = reference_true3d_loss(r2, t2, timesteps=32,
                                 zero_weighting=0.5, nonzero_weighting=2.0)
    np.testing.assert_allclose(np.asarray(out2), np.asarray(ref2), rtol=1e-5, atol=1e-7)

    # Test 3: tiny, non-8-aligned row count (full-extent block fallback path).
    r3 = jax.random.uniform(k5, (1, 1, 5, 96), dtype=jnp.float32)
    t3 = jax.random.uniform(k6, (1, 1, 5, 96), dtype=jnp.float32)
    out3 = jax.block_until_ready(true3d_loss(r3, t3, timesteps=1000))
    ref3 = reference_true3d_loss(r3, t3, timesteps=1000)
    np.testing.assert_allclose(np.asarray(out3), np.asarray(ref3), rtol=1e-5, atol=1e-7)

    print("KERNEL_OK")
</pallas_src>

<mosaic_0001>
module attributes {stable_mosaic.version = 11 : i64} {
  func.func @_true3d_loss_kernel(%arg0: i32, %arg1: i32, %arg2: memref<16x128xf32, #tpu.memory_space<vmem>>, %arg3: memref<16x128xf32, #tpu.memory_space<vmem>>, %arg4: memref<1x8x128xi32, #tpu.memory_space<vmem>>) attributes {dimension_semantics = [#tpu.dimension_semantics<parallel>, #tpu.dimension_semantics<arbitrary>], iteration_bounds = array<i64: 1, 1>, scalar_prefetch = 0 : i64, scratch_operands = 0 : i64, tpu.core_type = #tpu.core_type<tc>, window_params = [{transform_indices = @transform_0, window_bounds = array<i64: 16, 128>}, {transform_indices = @transform_1, window_bounds = array<i64: 16, 128>}, {transform_indices = @transform_2, window_bounds = array<i64: 1, 8, 128>}]} {
    %c0_i32 = arith.constant 0 : i32
    %0 = arith.cmpi eq, %arg1, %c0_i32 : i32
    %1 = arith.extui %0 : i1 to i32
    %c0_i32_0 = arith.constant 0 : i32
    %2 = arith.cmpi ne, %1, %c0_i32_0 : i32
    scf.if %2 {
      %c0_i32_16 = arith.constant 0 : i32
      %27 = vector.broadcast %c0_i32_16 : i32 to vector<1x8x128xi32>
      %c0_17 = arith.constant 0 : index
      %c0_18 = arith.constant 0 : index
      %c0_19 = arith.constant 0 : index
      %28 = vector.load %arg4[%c0_17, %c0_18, %c0_19] : memref<1x8x128xi32, #tpu.memory_space<vmem>>, vector<1x8x128xi32>
      tpu.vector_store %arg4[%c0_17, %c0_18, %c0_19], %27 {strides = array<i32>} : memref<1x8x128xi32, #tpu.memory_space<vmem>>, vector<1x8x128xi32>,
    } else {
    }
    %c0 = arith.constant 0 : index
    %c0_1 = arith.constant 0 : index
    %3 = vector.load %arg2[%c0, %c0_1] : memref<16x128xf32, #tpu.memory_space<vmem>>, vector<16x128xf32>
    %cst = arith.constant 1.000000e+03 : f32
    %4 = vector.broadcast %cst : f32 to vector<16x128xf32>
    %5 = arith.mulf %3, %4 : vector<16x128xf32>
    %cst_2 = arith.constant 1.000000e+00 : f32
    %6 = vector.broadcast %cst_2 : f32 to vector<16x128xf32>
    %7 = arith.subf %5, %6 : vector<16x128xf32>
    %cst_3 = arith.constant 0.000000e+00 : f32
    %8 = vector.broadcast %cst_3 : f32 to vector<16x128xf32>
    %9 = arith.maximumf %7, %8 : vector<16x128xf32>
    %10 = arith.fptosi %9 : vector<16x128xf32> to vector<16x128xi32>
    %c0_4 = arith.constant 0 : index
    %c0_5 = arith.constant 0 : index
    %11 = vector.load %arg3[%c0_4, %c0_5] : memref<16x128xf32, #tpu.memory_space<vmem>>, vector<16x128xf32>
    %cst_6 = arith.constant 1.000000e+03 : f32
    %12 = vector.broadcast %cst_6 : f32 to vector<16x128xf32>
    %13 = arith.mulf %11, %12 : vector<16x128xf32>
    %cst_7 = arith.constant 1.000000e+00 : f32
    %14 = vector.broadcast %cst_7 : f32 to vector<16x128xf32>
    %15 = arith.subf %13, %14 : vector<16x128xf32>
    %cst_8 = arith.constant 0.000000e+00 : f32
    %16 = vector.broadcast %cst_8 : f32 to vector<16x128xf32>
    %17 = arith.maximumf %15, %16 : vector<16x128xf32>
    %18 = arith.fptosi %17 : vector<16x128xf32> to vector<16x128xi32>
    %19 = arith.cmpi ne, %10, %18 : vector<16x128xi32>
    %20 = arith.extui %19 : vector<16x128xi1> to vector<16x128xi32>
    %c0_9 = arith.constant 0 : index
    %c0_10 = arith.constant 0 : index
    %c0_11 = arith.constant 0 : index
    %21 = vector.load %arg4[%c0_9, %c0_10, %c0_11] : memref<1x8x128xi32, #tpu.memory_space<vmem>>, vector<1x8x128xi32>
    %22 = vector.shape_cast %20 : vector<16x128xi32> to vector<2x8x128xi32>
    %cst_12 = arith.constant dense<0> : vector<8x128xi32>
    %23 = vector.multi_reduction <add>, %22, %cst_12 [0] : vector<2x8x128xi32> to vector<8x128xi32>
    %24 = vector.shape_cast %23 : vector<8x128xi32> to vector<1x8x128xi32>
    %25 = arith.addi %21, %24 : vector<1x8x128xi32>
    %c0_13 = arith.constant 0 : index
    %c0_14 = arith.constant 0 : index
    %c0_15 = arith.constant 0 : index
    %26 = vector.load %arg4[%c0_13, %c0_14, %c0_15] : memref<1x8x128xi32, #tpu.memory_space<vmem>>, vector<1x8x128xi32>
    tpu.vector_store %arg4[%c0_13, %c0_14, %c0_15], %25 {strides = array<i32>} : memref<1x8x128xi32, #tpu.memory_space<vmem>>, vector<1x8x128xi32>,
    return
  }
  func.func @transform_0(%arg0: i32, %arg1: i32) -> (i32, i32) {
    %c1_i32 = arith.constant 1 : i32
    %0 = arith.muli %arg0, %c1_i32 : i32
    %1 = arith.addi %0, %arg1 : i32
    %c0_i32 = arith.constant 0 : i32
    %2 = arith.minsi %1, %c0_i32 : i32
    %c0_i32_0 = arith.constant 0 : i32
    %c0_i32_1 = arith.constant 0 : i32
    return %2, %c0_i32_0 : i32, i32
  }
  func.func @transform_1(%arg0: i32, %arg1: i32) -> (i32, i32) {
    %c1_i32 = arith.constant 1 : i32
    %0 = arith.muli %arg0, %c1_i32 : i32
    %1 = arith.addi %0, %arg1 : i32
    %c0_i32 = arith.constant 0 : i32
    %2 = arith.minsi %1, %c0_i32 : i32
    %c0_i32_0 = arith.constant 0 : i32
    %c0_i32_1 = arith.constant 0 : i32
    return %2, %c0_i32_0 : i32, i32
  }
  func.func @transform_2(%arg0: i32, %arg1: i32) -> (i32, i32, i32) {
    %c0_i32 = arith.constant 0 : i32
    %c0_i32_0 = arith.constant 0 : i32
    %c0_i32_1 = arith.constant 0 : i32
    return %arg0, %c0_i32, %c0_i32_0 : i32, i32, i32
  }
}

</mosaic_0001>

<llo_original>
// kernel: tpu_custom_call.1
$region0: #{tpu_custom_call.1}
  #allocation0 [shape = 'u32[]', space=smem, size = 0x4, offset = 0x4, fixed_abs, tag = 'smem constant byte address 0x4 - core index']
  #allocation1 [shape = 'u32[144,128]{1,0:T(1,128)}', space=vmem, size = 0x12000, scoped, tag = 'internal scratch']
  %s0 = inlined_call_operand.hbm [shape: f32[16,128], index: 0, kind: input, shape index: {}]
  %s1 = inlined_call_operand.hbm [shape: f32[16,128], index: 1, kind: input, shape index: {}]
  %s2 = inlined_call_operand.hbm [shape: s32[1,8,128], index: 2, kind: output, shape index: {}]
  %s3 = sld [smem:[#allocation0]]
  $region30: #{tpu_custom_call.1} parent=0
    _
  %s5 = ssub.s32 1, %s3
  %s6 = scalar_select 0, %s5, %s3
  $region1: #{tpu_custom_call.1} parent=0
    #allocation2 [shape = 'u8[8192]{0}', space=vmem, size = 0x2000, scoped, tag = 'input window, operand 0, single buffered']
    #allocation3 [shape = 's32[1]{0}', space=sflag, size = 0x4, scoped, tag = 'scoped memory for tpu_custom_call.1']
    #allocation4 [shape = 's32[1]{0}', space=sflag, size = 0x4, scoped, tag = 'scoped memory for tpu_custom_call.1']
    #allocation5 [shape = 'u8[8192]{0}', space=vmem, size = 0x2000, scoped, tag = 'input window, operand 1, single buffered']
    #allocation6 [shape = 's32[1]{0}', space=sflag, size = 0x4, scoped, tag = 'scoped memory for tpu_custom_call.1']
    #allocation7 [shape = 'u8[4096]{0}', space=vmem, size = 0x1000, scoped, tag = 'output window, operand 0, single buffered']
    %7 = vsyncpa [#allocation3], 0
    %8 = vsyncpa [#allocation6], 0
    %9 = vsyncpa [#allocation4], 0
    // Predicated region
    $region2: #{tpu_custom_call.1} parent=1 // pred_check
      _
    $region3: #{tpu_custom_call.1} parent=1 // pred_check_branch
      %11 = sbr.rel (0) target = $region5
    $region4: #{tpu_custom_call.1} parent=1 // pred_region
      %s12 = sadd.s32 0, 0
      %p13 = scmp.lt.s32.totalorder %s12, 0
      %s14 = scalar_select %p13, %s12, 0
      %s15 = smul.u32 2, %s14
      %s17 = ssub.s32 256, 256
      %18 = vsyncadd [#allocation3], %s17
      %s19 = smul.addr %s15, 128
      %s20 = scalar_lea.hbm %s0, %s19
      %s21 = sshll.u32 [#allocation2], 4
      %s22 = int_to_ptr.vmem [resolvable:$true] %s21
      %27 = dma.hbm_to_vmem [thread:$0]  %s20, 256, %s22, [#allocation3], 128, 128, 8
    $region5: #{tpu_custom_call.1} parent=1 // pred_fallthru
      _
    // Predicated region
    $region6: #{tpu_custom_call.1} parent=1 // pred_check
      _
    $region7: #{tpu_custom_call.1} parent=1 // pred_check_branch
      %29 = sbr.rel (0) target = $region9
    $region8: #{tpu_custom_call.1} parent=1 // pred_region
      %s30 = sadd.s32 0, 0
      %p31 = scmp.lt.s32.totalorder %s30, 0
      %s32 = scalar_select %p31, %s30, 0
      %s33 = smul.u32 2, %s32
      %s35 = ssub.s32 256, 256
      %36 = vsyncadd [#allocation6], %s35
      %s37 = smul.addr %s33, 128
      %s38 = scalar_lea.hbm %s1, %s37
      %s39 = sshll.u32 [#allocation5], 4
      %s40 = int_to_ptr.vmem [resolvable:$true] %s39
      %45 = dma.hbm_to_vmem [thread:$0]  %s38, 256, %s40, [#allocation6], 128, 128, 8
    $region9: #{tpu_custom_call.1} parent=1 // pred_fallthru
      _
    // Predicated region
    $region10: #{tpu_custom_call.1} parent=1 // pred_check
      _
    $region11: #{tpu_custom_call.1} parent=1 // pred_check_branch
      %47 = sbr.rel (0) target = $region13
    $region12: #{tpu_custom_call.1} parent=1 // pred_region
      %48 = dma.done [#allocation3], 256
    $region13: #{tpu_custom_call.1} parent=1 // pred_fallthru
      _
    // Predicated region
    $region14: #{tpu_custom_call.1} parent=1 // pred_check
      _
    $region15: #{tpu_custom_call.1} parent=1 // pred_check_branch
      %50 = sbr.rel (0) target = $region17
    $region16: #{tpu_custom_call.1} parent=1 // pred_region
      %51 = dma.done [#allocation6], 256
    $region17: #{tpu_custom_call.1} parent=1 // pred_fallthru
      _
    %s52 = sadd.s32 0, 0
    %p53 = scmp.lt.s32.totalorder %s52, 0
    %s54 = scalar_select %p53, %s52, 0
    %s55 = smul.u32 2, %s54
    %s56 = sadd.s32 0, 0
    %p57 = scmp.lt.s32.totalorder %s56, 0
    %s58 = scalar_select %p57, %s56, 0
    %s59 = smul.u32 2, %s58
    %p60 = scmp.eq.s32.totalorder 0, 0
    // Predicated region
    $region18: #{tpu_custom_call.1} parent=1 // pred_check
      %p61 = pneg %p60
    $region19: #{tpu_custom_call.1} parent=1 // pred_check_branch
      %63 = sbr.rel (%p61) target = $region21
    $region20: #{tpu_custom_call.1} parent=1 // pred_region
      %64 = vst [vmem:[#allocation7] sm:$0xff] 0
    $region21: #{tpu_custom_call.1} parent=1 // pred_fallthru
      _
    %v65 = vld [vmem:[#allocation2] sm:$0xff]
    %v66 = vld [vmem:[#allocation2 + $0x8] sm:$0xff]
    %v67 = vmul.f32 %v65, 1000.0
    %v68 = vmul.f32 %v66, 1000.0
    %v69 = vsub.f32 %v67, 1.0
    %v70 = vsub.f32 %v68, 1.0
    %v71 = vmax.f32 %v69, 0.0
    %v72 = vmax.f32 %v70, 0.0
    %v73 = vcvt.f32.s32.to.zero.pseudo %v71
    %v74 = vcvt.f32.s32.to.zero.pseudo %v72
    %v75 = vld [vmem:[#allocation5] sm:$0xff]
    %v76 = vld [vmem:[#allocation5 + $0x8] sm:$0xff]
    %v77 = vmul.f32 %v75, 1000.0
    %v78 = vmul.f32 %v76, 1000.0
    %v79 = vsub.f32 %v77, 1.0
    %v80 = vsub.f32 %v78, 1.0
    %v81 = vmax.f32 %v79, 0.0
    %v82 = vmax.f32 %v80, 0.0
    %v83 = vcvt.f32.s32.to.zero.pseudo %v81
    %v84 = vcvt.f32.s32.to.zero.pseudo %v82
    %vm85 = vcmp.ne.s32.totalorder %v73, %v83
    %vm86 = vcmp.ne.s32.totalorder %v74, %v84
    %v87 = vsel %vm85, 1, 0
    %v88 = vsel %vm86, 1, 0
    %v89 = vld [vmem:[#allocation7] sm:$0xff]
    %v90 = vadd.s32 %v87, %v88
    %v91 = vadd.s32 %v89, %v90
    %92 = vst [vmem:[#allocation7] sm:$0xff] %v91
    // Predicated region
    $region22: #{tpu_custom_call.1} parent=1 // pred_check
      _
    $region23: #{tpu_custom_call.1} parent=1 // pred_check_branch
      %94 = sbr.rel (0) target = $region25
    $region24: #{tpu_custom_call.1} parent=1 // pred_region
      %s96 = ssub.s32 128, 128
      %97 = vsyncadd [#allocation4], %s96
      %s99 = sshll.u32 [#allocation7], 4
      %s100 = int_to_ptr.vmem [resolvable:$true] %s99
      %102 = dma.vmem_to_hbm [thread:$0]  %s100, 128, %s2, [#allocation4]
    $region25: #{tpu_custom_call.1} parent=1 // pred_fallthru
      _
    // Predicated region
    $region26: #{tpu_custom_call.1} parent=1 // pred_check
      _
    $region27: #{tpu_custom_call.1} parent=1 // pred_check_branch
      %104 = sbr.rel (0) target = $region29
    $region28: #{tpu_custom_call.1} parent=1 // pred_region
      %105 = dma.done [#allocation4], 128
    $region29: #{tpu_custom_call.1} parent=1 // pred_fallthru
      _
    %106 = vsyncpa [#allocation3], 1
    %107 = vsyncpa [#allocation6], 1
    %108 = vsyncpa [#allocation4], 1

</llo_original>
